<compile_context>
chip_gen: v6e
topology: v6e:2x2x1
jax: 0.10.0
libtpu: 0.0.40
codegen_flags: <defaults>
</compile_context>

<pallas_src>
import math

import jax
import jax.numpy as jnp
from jax.experimental import pallas as pl
from jax.experimental.pallas import tpu as pltpu

LANE = 128      # f32 lane width of a vreg
SUBLANE = 8     # f32 sublane count of a vreg
_NEG_FILL = -1e30  # large-negative fill for masked softmax lanes (avoids inf/NaN paths)


# ---------------------------------------------------------------------------
# Model config (same schema ConfiguredModel.build_network consumes)
# ---------------------------------------------------------------------------
MODEL_CONFIGS = {
    "layers": [
        {"name": "flatten"},
        {"name": "linear", "in_shape": 784, "out_shape": 128},
        {"name": "relu"},
        {"name": "dropout", "prob": 0.5},
        {"name": "linear", "in_shape": 128, "out_shape": 64},
        {"name": "tanh"},
        {"name": "linear", "in_shape": 64, "out_shape": 10},
        {"name": "log_softmax"},
    ]
}


def _round_up(n, m):
    return ((n + m - 1) // m) * m


# ---------------------------------------------------------------------------
# Per-layer math (traced inside the Pallas kernel body AND usable as reference)
# `valid` / `width` describe how many of the last-dim lanes are real vs. padded.
# ---------------------------------------------------------------------------
def _apply_nonlinear(name, layer, h, valid, width):
    h = h.astype(jnp.float32)
    if name == "relu":
        return jnp.maximum(h, 0.0)
    if name == "leaky_relu":
        slope = layer.get("slope", 0.01)
        return jnp.where(h >= 0, h, slope * h)
    if name == "elu":
        alpha = layer.get("alpha", 1.0)
        return jnp.where(h > 0, h, alpha * (jnp.exp(h) - 1.0))
    if name == "sigmoid":
        return 1.0 / (1.0 + jnp.exp(-h))
    if name == "log_sigmoid":
        # numerically stable log(sigmoid(h))
        return jnp.where(h >= 0, -jnp.log1p(jnp.exp(-h)), h - jnp.log1p(jnp.exp(h)))
    if name == "tanh":
        return jnp.tanh(h)
    if name in ("softmax", "log_softmax"):
        if valid < width:
            # Mask padded lanes so they do not pollute the row-wise reduction.
            col = jax.lax.broadcasted_iota(jnp.int32, h.shape, h.ndim - 1)
            h = jnp.where(col < valid, h, _NEG_FILL)
        m = jnp.max(h, axis=-1, keepdims=True)
        s = h - m
        e = jnp.exp(s)
        denom = jnp.sum(e, axis=-1, keepdims=True)
        if name == "softmax":
            return e / denom
        return s - jnp.log(denom)
    if name == "dropout":
        # Inference semantics (identity), matching the torch.no_grad() path in is_valid().
        # TODO(synk): training-mode dropout via pltpu.prng_seed + pltpu.stateful_bernoulli.
        return h
    if name == "flatten":
        return h  # flatten is pure layout glue; handled in the wrapper
    raise ValueError(f"Layer type {name} unsupported.")


# ---------------------------------------------------------------------------
# Fused kernel: whole Sequential for one (TILE_B, feature) batch tile
# ---------------------------------------------------------------------------
def make_fused_kernel(ops, out_valid):
    def kernel(*refs):
        x_ref = refs[0]
        out_ref = refs[-1]
        prefs = refs[1:-1]

        h = x_ref[...]  # bf16 (TILE_B, in_dim_pad)
        for op in ops:
            kind = op["kind"]
            if kind == "linear":
                w = prefs[op["pidx"]][...]          # bf16 (K_pad, N_pad)
                b = prefs[op["pidx"] + 1][...]      # f32  (1, N_pad)
                h = jnp.dot(h.astype(w.dtype), w,
                            preferred_element_type=jnp.float32) + b
            else:
                h = _apply_nonlinear(kind, op["layer"], h, op["valid"], op["width"])

        h = h.astype(jnp.float32)
        if out_valid < out_ref.shape[-1]:
            # Keep the padded output lanes as clean zeros (lane-dense unmasked store).
            col = jax.lax.broadcasted_iota(jnp.int32, h.shape, h.ndim - 1)
            h = jnp.where(col < out_valid, h, 0.0)
        out_ref[...] = h.astype(out_ref.dtype)

    return kernel


# ---------------------------------------------------------------------------
# Parameter init (torch.nn.Linear default: U(-1/sqrt(fan_in), 1/sqrt(fan_in)))
# ---------------------------------------------------------------------------
def init_params(layers, key):
    params = []
    for layer in layers:
        if layer["name"] != "linear":
            continue
        fan_in, fan_out = layer["in_shape"], layer["out_shape"]
        k = 1.0 / math.sqrt(fan_in)
        key, kw, kb = jax.random.split(key, 3)
        w = jax.random.uniform(kw, (fan_in, fan_out), jnp.float32, -k, k)
        b = jax.random.uniform(kb, (fan_out,), jnp.float32, -k, k)
        params.append((w, b))
    return params


def prepare_padded_params(params, compute_dtype=jnp.bfloat16):
    """Zero-pad each linear's (in, out) dims to multiples of 128; weights -> bf16."""
    padded = []
    for w, b in params:
        kin, kout = w.shape
        kin_p, kout_p = _round_up(kin, LANE), _round_up(kout, LANE)
        wp = jnp.zeros((kin_p, kout_p), jnp.float32).at[:kin, :kout].set(w)
        bp = jnp.zeros((1, kout_p), jnp.float32).at[0, :kout].set(b)
        padded.append((wp.astype(compute_dtype), bp))
    return padded


# ---------------------------------------------------------------------------
# Wrapper: flatten + padding glue, batch-tiled pallas_call
# ---------------------------------------------------------------------------
def configured_model_forward(x, params_padded, layers, *, tile_b=256,
                             compute_dtype=jnp.bfloat16):
    batch = x.shape[0]
    x2d = x.reshape(batch, -1)                       # nn.Flatten()
    in_dim = x2d.shape[-1]
    in_dim_p = _round_up(in_dim, LANE)

    # Pad batch to >= one sublane group, pick the row tile, round batch up to it.
    b_pad = _round_up(max(batch, SUBLANE), SUBLANE)
    tb = _round_up(min(tile_b, b_pad), SUBLANE)
    b_pad = _round_up(b_pad, tb)

    xp = jnp.zeros((b_pad, in_dim_p), compute_dtype)
    xp = xp.at[:batch, :in_dim].set(x2d.astype(compute_dtype))

    # Build op list + flat param list, tracking valid/padded feature widths.
    ops, flat_params = [], []
    valid, width = in_dim, in_dim_p
    li = 0
    for layer in layers:
        name = layer["name"]
        if name == "flatten":
            continue
        if name == "linear":
            w, b = params_padded[li]
            li += 1
            ops.append({"kind": "linear", "pidx": len(flat_params), "layer": layer,
                        "valid": valid, "width": width})
            flat_params.append(w)
            flat_params.append(b)
            valid, width = layer["out_shape"], w.shape[-1]
        else:
            ops.append({"kind": name, "layer": layer, "valid": valid, "width": width})

    out_valid, out_width = valid, width
    grid = (b_pad // tb,)

    in_specs = [pl.BlockSpec((tb, in_dim_p), lambda i: (i, 0))]
    for p in flat_params:
        # Weights / biases pinned to block (0, 0): VMEM-resident across grid steps.
        in_specs.append(pl.BlockSpec(p.shape, lambda i: (0, 0)))
    out_spec = pl.BlockSpec((tb, out_width), lambda i: (i, 0))

    # Advisory cost estimate for XLA's scheduler.
    flops = 0
    transcendentals = 0
    d_prev = in_dim_p
    for op in ops:
        if op["kind"] == "linear":
            w = flat_params[op["pidx"]]
            flops += 2 * b_pad * w.shape[0] * w.shape[1]
            d_prev = w.shape[1]
        elif op["kind"] in ("tanh", "sigmoid", "log_sigmoid", "elu",
                            "softmax", "log_softmax"):
            transcendentals += b_pad * d_prev
    bytes_accessed = int(
        xp.size * xp.dtype.itemsize
        + sum(int(p.size) * p.dtype.itemsize for p in flat_params)
        + b_pad * out_width * 4
    )

    kernel = make_fused_kernel(ops, out_valid)

    out_padded = pl.pallas_call(
        kernel,
        out_shape=jax.ShapeDtypeStruct((b_pad, out_width), jnp.float32),
        grid=grid,
        in_specs=in_specs,
        out_specs=out_spec,
        compiler_params=pltpu.CompilerParams(
            dimension_semantics=("parallel",),
            vmem_limit_bytes=32 * 1024 * 1024,
        ),
        cost_estimate=pl.CostEstimate(
            flops=int(flops),
            transcendentals=int(transcendentals),
            bytes_accessed=bytes_accessed,
        ),
    )(xp, *flat_params)

    return out_padded[:batch, :out_valid]


# ---------------------------------------------------------------------------
# References
# ---------------------------------------------------------------------------
def reference_forward_padded(x, params_padded, layers, compute_dtype=jnp.bfloat16):
    """Same padded / mixed-precision math as the kernel, in plain JAX."""
    batch = x.shape[0]
    h2d = x.reshape(batch, -1)
    in_dim = h2d.shape[-1]
    in_dim_p = _round_up(in_dim, LANE)
    h = jnp.zeros((batch, in_dim_p), compute_dtype).at[:, :in_dim].set(
        h2d.astype(compute_dtype))
    valid, width = in_dim, in_dim_p
    li = 0
    for layer in layers:
        name = layer["name"]
        if name == "flatten":
            continue
        if name == "linear":
            w, b = params_padded[li]
            li += 1
            h = jnp.dot(h.astype(w.dtype), w, preferred_element_type=jnp.float32) + b
            valid, width = layer["out_shape"], w.shape[-1]
        else:
            h = _apply_nonlinear(name, layer, h, valid, width)
    return h[:, :valid]


def reference_forward_f32(x, params, layers):
    """Unpadded full-f32 reference == original module semantics."""
    h = x.reshape(x.shape[0], -1).astype(jnp.float32)
    pi = 0
    for layer in layers:
        if layer["name"] == "linear":
            w, b = params[pi]
            pi += 1
            h = h @ w + b
        elif layer["name"] == "flatten":
            continue
        else:
            h = _apply_nonlinear(layer["name"], layer, h, h.shape[-1], h.shape[-1])
    return h


if __name__ == "__main__":
    layers = MODEL_CONFIGS["layers"]

    key = jax.random.PRNGKey(0)
    key, kx = jax.random.split(key)

    # Matches ConfiguredModel.is_valid(): batch=32, image_shape=(1, 28, 28), 10 classes.
    x = jax.random.uniform(kx, (32, 1, 28, 28), jnp.float32)

    params = init_params(layers, key)
    params_padded = prepare_padded_params(params)

    out = configured_model_forward(x, params_padded, layers)
    out = jax.block_until_ready(out)
    assert out.shape == (32, 10), out.shape
    assert bool(jnp.all(jnp.isfinite(out))), "non-finite output"

    # Tight check vs. identical mixed-precision math in plain JAX.
    ref_mp = reference_forward_padded(x, params_padded, layers)
    assert jnp.allclose(out, ref_mp, atol=2e-2, rtol=2e-2), "mismatch vs. padded bf16 reference"

    # Loose check vs. the original full-f32 module semantics (bf16 weight rounding only).
    ref_f32 = reference_forward_f32(x, params, layers)
    assert jnp.allclose(out, ref_f32, atol=5e-2, rtol=5e-2), "mismatch vs. f32 reference"

    print("KERNEL_OK")
</pallas_src>

<mosaic_0001>
module attributes {stable_mosaic.version = 11 : i64} {
  func.func @kernel(%arg0: i32, %arg1: memref<32x896xbf16, #tpu.memory_space<vmem>>, %arg2: memref<896x128xbf16, #tpu.memory_space<vmem>>, %arg3: memref<1x128xf32, #tpu.memory_space<vmem>>, %arg4: memref<128x128xbf16, #tpu.memory_space<vmem>>, %arg5: memref<1x128xf32, #tpu.memory_space<vmem>>, %arg6: memref<128x128xbf16, #tpu.memory_space<vmem>>, %arg7: memref<1x128xf32, #tpu.memory_space<vmem>>, %arg8: memref<32x128xf32, #tpu.memory_space<vmem>>) attributes {dimension_semantics = [#tpu.dimension_semantics<parallel>], iteration_bounds = array<i64: 1>, scalar_prefetch = 0 : i64, scratch_operands = 0 : i64, tpu.core_type = #tpu.core_type<tc>, window_params = [{transform_indices = @transform_0, window_bounds = array<i64: 32, 896>}, {pipeline_mode = #tpu.pipeline_mode<synchronous>, transform_indices = @transform_1, window_bounds = array<i64: 896, 128>}, {pipeline_mode = #tpu.pipeline_mode<synchronous>, transform_indices = @transform_2, window_bounds = array<i64: 1, 128>}, {pipeline_mode = #tpu.pipeline_mode<synchronous>, transform_indices = @transform_3, window_bounds = array<i64: 128, 128>}, {pipeline_mode = #tpu.pipeline_mode<synchronous>, transform_indices = @transform_4, window_bounds = array<i64: 1, 128>}, {pipeline_mode = #tpu.pipeline_mode<synchronous>, transform_indices = @transform_5, window_bounds = array<i64: 128, 128>}, {pipeline_mode = #tpu.pipeline_mode<synchronous>, transform_indices = @transform_6, window_bounds = array<i64: 1, 128>}, {transform_indices = @transform_7, window_bounds = array<i64: 32, 128>}]} {
    %c0 = arith.constant 0 : index
    %c0_0 = arith.constant 0 : index
    %0 = vector.load %arg1[%c0, %c0_0] : memref<32x896xbf16, #tpu.memory_space<vmem>>, vector<32x896xbf16>
    %c0_1 = arith.constant 0 : index
    %c0_2 = arith.constant 0 : index
    %1 = vector.load %arg2[%c0_1, %c0_2] : memref<896x128xbf16, #tpu.memory_space<vmem>>, vector<896x128xbf16>
    %c0_3 = arith.constant 0 : index
    %c0_4 = arith.constant 0 : index
    %2 = vector.load %arg3[%c0_3, %c0_4] : memref<1x128xf32, #tpu.memory_space<vmem>>, vector<1x128xf32>
    %cst = arith.constant dense<0.000000e+00> : vector<32x128xf32>
    %3 = tpu.matmul %0, %1, %cst {dimension_numbers = #tpu.dot_dimension_numbers<[1], [0], [0], [1], [0, 0, 1, 1], [], []>} : vector<32x896xbf16>, vector<896x128xbf16>, vector<32x128xf32> -> vector<32x128xf32>
    %4 = vector.broadcast %2 : vector<1x128xf32> to vector<32x128xf32>
    %5 = arith.addf %3, %4 : vector<32x128xf32>
    %cst_5 = arith.constant 0.000000e+00 : f32
    %6 = vector.broadcast %cst_5 : f32 to vector<32x128xf32>
    %7 = arith.maximumf %5, %6 : vector<32x128xf32>
    %c0_6 = arith.constant 0 : index
    %c0_7 = arith.constant 0 : index
    %8 = vector.load %arg4[%c0_6, %c0_7] : memref<128x128xbf16, #tpu.memory_space<vmem>>, vector<128x128xbf16>
    %c0_8 = arith.constant 0 : index
    %c0_9 = arith.constant 0 : index
    %9 = vector.load %arg5[%c0_8, %c0_9] : memref<1x128xf32, #tpu.memory_space<vmem>>, vector<1x128xf32>
    %10 = arith.truncf %7 : vector<32x128xf32> to vector<32x128xbf16>
    %cst_10 = arith.constant dense<0.000000e+00> : vector<32x128xf32>
    %11 = tpu.matmul %10, %8, %cst_10 {dimension_numbers = #tpu.dot_dimension_numbers<[1], [0], [0], [1], [0, 0, 1, 1], [], []>} : vector<32x128xbf16>, vector<128x128xbf16>, vector<32x128xf32> -> vector<32x128xf32>
    %12 = vector.broadcast %9 : vector<1x128xf32> to vector<32x128xf32>
    %13 = arith.addf %11, %12 : vector<32x128xf32>
    %14 = math.tanh %13 : vector<32x128xf32>
    %c0_11 = arith.constant 0 : index
    %c0_12 = arith.constant 0 : index
    %15 = vector.load %arg6[%c0_11, %c0_12] : memref<128x128xbf16, #tpu.memory_space<vmem>>, vector<128x128xbf16>
    %c0_13 = arith.constant 0 : index
    %c0_14 = arith.constant 0 : index
    %16 = vector.load %arg7[%c0_13, %c0_14] : memref<1x128xf32, #tpu.memory_space<vmem>>, vector<1x128xf32>
    %17 = arith.truncf %14 : vector<32x128xf32> to vector<32x128xbf16>
    %cst_15 = arith.constant dense<0.000000e+00> : vector<32x128xf32>
    %18 = tpu.matmul %17, %15, %cst_15 {dimension_numbers = #tpu.dot_dimension_numbers<[1], [0], [0], [1], [0, 0, 1, 1], [], []>} : vector<32x128xbf16>, vector<128x128xbf16>, vector<32x128xf32> -> vector<32x128xf32>
    %19 = vector.broadcast %16 : vector<1x128xf32> to vector<32x128xf32>
    %20 = arith.addf %18, %19 : vector<32x128xf32>
    %21 = tpu.iota {dimensions = array<i32: 1>} : vector<32x128xi32>
    %c10_i32 = arith.constant 10 : i32
    %22 = vector.broadcast %c10_i32 : i32 to vector<32x128xi32>
    %23 = arith.cmpi slt, %21, %22 : vector<32x128xi32>
    %cst_16 = arith.constant -1.000000e+30 : f32
    %24 = vector.broadcast %cst_16 : f32 to vector<32x128xf32>
    %25 = arith.select %23, %20, %24 : vector<32x128xi1>, vector<32x128xf32>
    %cst_17 = arith.constant dense<0xFF800000> : vector<32xf32>
    %26 = vector.multi_reduction <maximumf>, %25, %cst_17 [1] : vector<32x128xf32> to vector<32xf32>
    %27 = vector.shape_cast %26 : vector<32xf32> to vector<32x1xf32>
    %28 = vector.broadcast %27 : vector<32x1xf32> to vector<32x128xf32>
    %29 = arith.subf %25, %28 : vector<32x128xf32>
    %30 = math.exp %29 : vector<32x128xf32>
    %cst_18 = arith.constant dense<0.000000e+00> : vector<32xf32>
    %31 = vector.multi_reduction <add>, %30, %cst_18 [1] : vector<32x128xf32> to vector<32xf32>
    %32 = vector.shape_cast %31 : vector<32xf32> to vector<32x1xf32>
    %33 = math.log %32 : vector<32x1xf32>
    %34 = vector.broadcast %33 : vector<32x1xf32> to vector<32x128xf32>
    %35 = arith.subf %29, %34 : vector<32x128xf32>
    %36 = tpu.iota {dimensions = array<i32: 1>} : vector<32x128xi32>
    %c10_i32_19 = arith.constant 10 : i32
    %37 = vector.broadcast %c10_i32_19 : i32 to vector<32x128xi32>
    %38 = arith.cmpi slt, %36, %37 : vector<32x128xi32>
    %cst_20 = arith.constant 0.000000e+00 : f32
    %39 = vector.broadcast %cst_20 : f32 to vector<32x128xf32>
    %40 = arith.select %38, %35, %39 : vector<32x128xi1>, vector<32x128xf32>
    %c0_21 = arith.constant 0 : index
    %c0_22 = arith.constant 0 : index
    %41 = vector.load %arg8[%c0_21, %c0_22] : memref<32x128xf32, #tpu.memory_space<vmem>>, vector<32x128xf32>
    tpu.vector_store %arg8[%c0_21, %c0_22], %40 {strides = array<i32>} : memref<32x128xf32, #tpu.memory_space<vmem>>, vector<32x128xf32>,
    return
  }
  func.func @transform_0(%arg0: i32) -> (i32, i32) {
    %c0_i32 = arith.constant 0 : i32
    %c0_i32_0 = arith.constant 0 : i32
    return %arg0, %c0_i32 : i32, i32
  }
  func.func @transform_1(%arg0: i32) -> (i32, i32) {
    %c0_i32 = arith.constant 0 : i32
    %c0_i32_0 = arith.constant 0 : i32
    %c0_i32_1 = arith.constant 0 : i32
    return %c0_i32, %c0_i32_0 : i32, i32
  }
  func.func @transform_2(%arg0: i32) -> (i32, i32) {
    %c0_i32 = arith.constant 0 : i32
    %c0_i32_0 = arith.constant 0 : i32
    %c0_i32_1 = arith.constant 0 : i32
    return %c0_i32, %c0_i32_0 : i32, i32
  }
  func.func @transform_3(%arg0: i32) -> (i32, i32) {
    %c0_i32 = arith.constant 0 : i32
    %c0_i32_0 = arith.constant 0 : i32
    %c0_i32_1 = arith.constant 0 : i32
    return %c0_i32, %c0_i32_0 : i32, i32
  }
  func.func @transform_4(%arg0: i32) -> (i32, i32) {
    %c0_i32 = arith.constant 0 : i32
    %c0_i32_0 = arith.constant 0 : i32
    %c0_i32_1 = arith.constant 0 : i32
    return %c0_i32, %c0_i32_0 : i32, i32
  }
  func.func @transform_5(%arg0: i32) -> (i32, i32) {
    %c0_i32 = arith.constant 0 : i32
    %c0_i32_0 = arith.constant 0 : i32
    %c0_i32_1 = arith.constant 0 : i32
    return %c0_i32, %c0_i32_0 : i32, i32
  }
  func.func @transform_6(%arg0: i32) -> (i32, i32) {
    %c0_i32 = arith.constant 0 : i32
    %c0_i32_0 = arith.constant 0 : i32
    %c0_i32_1 = arith.constant 0 : i32
    return %c0_i32, %c0_i32_0 : i32, i32
  }
  func.func @transform_7(%arg0: i32) -> (i32, i32) {
    %c0_i32 = arith.constant 0 : i32
    %c0_i32_0 = arith.constant 0 : i32
    return %arg0, %c0_i32 : i32, i32
  }
}

</mosaic_0001>

<llo_original>
// kernel: tpu_custom_call.1
$region0: #{tpu_custom_call.1}
  #allocation0 [shape = 'u32[]', space=smem, size = 0x4, offset = 0x4, fixed_abs, tag = 'smem constant byte address 0x4 - core index']
  #allocation1 [shape = 'u32[144,128]{1,0:T(1,128)}', space=vmem, size = 0x12000, scoped, tag = 'internal scratch']
  %s0 = inlined_call_operand.hbm [shape: bf16[32,896], index: 0, kind: input, shape index: {}]
  %s1 = inlined_call_operand.hbm [shape: bf16[896,128], index: 1, kind: input, shape index: {}]
  %s2 = inlined_call_operand.vmem [shape: f32[1,128], index: 2, kind: input, shape index: {}]
  %s3 = inlined_call_operand.hbm [shape: bf16[128,128], index: 3, kind: input, shape index: {}]
  %s4 = inlined_call_operand.vmem [shape: f32[1,128], index: 4, kind: input, shape index: {}]
  %s5 = inlined_call_operand.hbm [shape: bf16[128,128], index: 5, kind: input, shape index: {}]
  %s6 = inlined_call_operand.vmem [shape: f32[1,128], index: 6, kind: input, shape index: {}]
  %s7 = inlined_call_operand.hbm [shape: f32[32,128], index: 7, kind: output, shape index: {}]
  %s8 = sld [smem:[#allocation0]]
  $region54: #{tpu_custom_call.1} parent=0
    _
  %s10 = ssub.s32 1, %s8
  %s11 = scalar_select 0, %s10, %s8
  $region1: #{tpu_custom_call.1} parent=0
    #allocation2 [shape = 'u8[57344]{0}', space=vmem, size = 0xe000, scoped, tag = 'input window, operand 0, single buffered']
    #allocation3 [shape = 's32[1]{0}', space=sflag, size = 0x4, scoped, tag = 'scoped memory for tpu_custom_call.1']
    #allocation4 [shape = 's32[1]{0}', space=sflag, size = 0x4, scoped, tag = 'scoped memory for tpu_custom_call.1']
    #allocation5 [shape = 'u8[229376]{0}', space=vmem, size = 0x38000, scoped, tag = 'input window, operand 1, single buffered']
    #allocation6 [shape = 's32[1]{0}', space=sflag, size = 0x4, scoped, tag = 'scoped memory for tpu_custom_call.1']
    #allocation7 [shape = 'u8[32768]{0}', space=vmem, size = 0x8000, scoped, tag = 'input window, operand 3, single buffered']
    #allocation8 [shape = 'u8[32768]{0}', space=vmem, size = 0x8000, scoped, tag = 'input window, operand 5, single buffered']
    #allocation9 [shape = 's32[1]{0}', space=sflag, size = 0x4, scoped, tag = 'scoped memory for tpu_custom_call.1']
    #allocation10 [shape = 'u8[16384]{0}', space=vmem, size = 0x4000, scoped, tag = 'output window, operand 0, single buffered']
    %12 = vsyncpa [#allocation3], 0
    %13 = vsyncpa [#allocation6], 0
    %14 = vsyncpa [#allocation9], 0
    %15 = vsyncpa [#allocation4], 0
    // Predicated region
    $region2: #{tpu_custom_call.1} parent=1 // pred_check
      _
    $region3: #{tpu_custom_call.1} parent=1 // pred_check_branch
      %17 = sbr.rel (0) target = $region5
    $region4: #{tpu_custom_call.1} parent=1 // pred_region
      %s19 = ssub.s32 1792, 1792
      %20 = vsyncadd [#allocation3], %s19
      %s21 = sshll.u32 [#allocation2], 4
      %s22 = int_to_ptr.vmem [resolvable:$true] %s21
      %27 = dma.hbm_to_vmem [thread:$0]  %s0, 1792, %s22, [#allocation3], 448, 448, 28
    $region5: #{tpu_custom_call.1} parent=1 // pred_fallthru
      _
    // Predicated region
    $region6: #{tpu_custom_call.1} parent=1 // pred_check
      _
    $region7: #{tpu_custom_call.1} parent=1 // pred_check_branch
      %29 = sbr.rel (0) target = $region9
    $region8: #{tpu_custom_call.1} parent=1 // pred_region
      %s31 = ssub.s32 7168, 7168
      %32 = vsyncadd [#allocation6], %s31
      %s33 = sshll.u32 [#allocation5], 4
      %s34 = int_to_ptr.vmem [resolvable:$true] %s33
      %39 = dma.hbm_to_vmem [thread:$0]  %s1, 7168, %s34, [#allocation6], 64, 64, 4
    $region9: #{tpu_custom_call.1} parent=1 // pred_fallthru
      _
    // Predicated region
    $region10: #{tpu_custom_call.1} parent=1 // pred_check
      _
    $region11: #{tpu_custom_call.1} parent=1 // pred_check_branch
      %41 = sbr.rel (0) target = $region13
    $region12: #{tpu_custom_call.1} parent=1 // pred_region
      _
    $region13: #{tpu_custom_call.1} parent=1 // pred_fallthru
      _
    // Predicated region
    $region14: #{tpu_custom_call.1} parent=1 // pred_check
      _
    $region15: #{tpu_custom_call.1} parent=1 // pred_check_branch
      %43 = sbr.rel (0) target = $region17
    $region16: #{tpu_custom_call.1} parent=1 // pred_region
      %s45 = ssub.s32 1024, 1024
      %46 = vsyncadd [#allocation6], %s45
      %s47 = sshll.u32 [#allocation7], 4
      %s48 = int_to_ptr.vmem [resolvable:$true] %s47
      %53 = dma.hbm_to_vmem [thread:$0]  %s3, 1024, %s48, [#allocation6], 64, 64, 4
    $region17: #{tpu_custom_call.1} parent=1 // pred_fallthru
      _
    // Predicated region
    $region18: #{tpu_custom_call.1} parent=1 // pred_check
      _
    $region19: #{tpu_custom_call.1} parent=1 // pred_check_branch
      %55 = sbr.rel (0) target = $region21
    $region20: #{tpu_custom_call.1} parent=1 // pred_region
      _
    $region21: #{tpu_custom_call.1} parent=1 // pred_fallthru
      _
    // Predicated region
    $region22: #{tpu_custom_call.1} parent=1 // pred_check
      _
    $region23: #{tpu_custom_call.1} parent=1 // pred_check_branch
      %57 = sbr.rel (0) target = $region25
    $region24: #{tpu_custom_call.1} parent=1 // pred_region
      %s59 = ssub.s32 1024, 1024
      %60 = vsyncadd [#allocation9], %s59
      %s61 = sshll.u32 [#allocation8], 4
      %s62 = int_to_ptr.vmem [resolvable:$true] %s61
      %67 = dma.hbm_to_vmem [thread:$0]  %s5, 1024, %s62, [#allocation9], 64, 64, 4
    $region25: #{tpu_custom_call.1} parent=1 // pred_fallthru
      _
    // Predicated region
    $region26: #{tpu_custom_call.1} parent=1 // pred_check
      _
    $region27: #{tpu_custom_call.1} parent=1 // pred_check_branch
      %69 = sbr.rel (0) target = $region29
    $region28: #{tpu_custom_call.1} parent=1 // pred_region
      _
    $region29: #{tpu_custom_call.1} parent=1 // pred_fallthru
      _
    // Predicated region
    $region30: #{tpu_custom_call.1} parent=1 // pred_check
      _
    $region31: #{tpu_custom_call.1} parent=1 // pred_check_branch
      %71 = sbr.rel (0) target = $region33
    $region32: #{tpu_custom_call.1} parent=1 // pred_region
      %72 = dma.done [#allocation3], 1792
    $region33: #{tpu_custom_call.1} parent=1 // pred_fallthru
      _
    // Predicated region
    $region34: #{tpu_custom_call.1} parent=1 // pred_check
      _
    $region35: #{tpu_custom_call.1} parent=1 // pred_check_branch
      %74 = sbr.rel (0) target = $region37
    $region36: #{tpu_custom_call.1} parent=1 // pred_region
      %75 = dma.done [#allocation6], 7168
    $region37: #{tpu_custom_call.1} parent=1 // pred_fallthru
      _
    // Predicated region
    $region38: #{tpu_custom_call.1} parent=1 // pred_check
      _
    $region39: #{tpu_custom_call.1} parent=1 // pred_check_branch
      %77 = sbr.rel (0) target = $region41
    $region40: #{tpu_custom_call.1} parent=1 // pred_region
      %78 = dma.done [#allocation6], 1024
    $region41: #{tpu_custom_call.1} parent=1 // pred_fallthru
      _
    // Predicated region
    $region42: #{tpu_custom_call.1} parent=1 // pred_check
      _
    $region43: #{tpu_custom_call.1} parent=1 // pred_check_branch
      %80 = sbr.rel (0) target = $region45
    $region44: #{tpu_custom_call.1} parent=1 // pred_region
      %81 = dma.done [#allocation9], 1024
    $region45: #{tpu_custom_call.1} parent=1 // pred_fallthru
      _
    %v83 = vld [vmem:[#allocation2] sm:$0xff]
    %v84 = vld [vmem:[#allocation2 + $0x8] sm:$0xff]
    %v85 = vld [vmem:[#allocation2 + $0x10] sm:$0xff]
    %v86 = vld [vmem:[#allocation2 + $0x18] sm:$0xf]
    %v87 = vld [vmem:[#allocation2 + $0x1c] sm:$0xff]
    %v88 = vld [vmem:[#allocation2 + $0x24] sm:$0xff]
    %v89 = vld [vmem:[#allocation2 + $0x2c] sm:$0xff]
    %v90 = vld [vmem:[#allocation2 + $0x34] sm:$0xf]
    %v91 = vld [vmem:[#allocation2 + $0x38] sm:$0xff]
    %v92 = vld [vmem:[#allocation2 + $0x40] sm:$0xff]
    %v93 = vld [vmem:[#allocation2 + $0x48] sm:$0xff]
    %v94 = vld [vmem:[#allocation2 + $0x50] sm:$0xf]
    %v95 = vld [vmem:[#allocation2 + $0x54] sm:$0xff]
    %v96 = vld [vmem:[#allocation2 + $0x5c] sm:$0xff]
    %v97 = vld [vmem:[#allocation2 + $0x64] sm:$0xff]
    %v98 = vld [vmem:[#allocation2 + $0x6c] sm:$0xf]
    %v99 = vld [vmem:[#allocation5] sm:$0xf]
    %v100 = vld [vmem:[#allocation5 + $0x4] sm:$0xf]
    %v101 = vld [vmem:[#allocation5 + $0x8] sm:$0xf]
    %v102 = vld [vmem:[#allocation5 + $0xc] sm:$0xf]
    %v103 = vld [vmem:[#allocation5 + $0x10] sm:$0xf]
    %v104 = vld [vmem:[#allocation5 + $0x14] sm:$0xf]
    %v105 = vld [vmem:[#allocation5 + $0x18] sm:$0xf]
    %v106 = vld [vmem:[#allocation5 + $0x1c] sm:$0xf]
    %v107 = vld [vmem:[#allocation5 + $0x20] sm:$0xf]
    %v108 = vld [vmem:[#allocation5 + $0x24] sm:$0xf]
    %v109 = vld [vmem:[#allocation5 + $0x28] sm:$0xf]
    %v110 = vld [vmem:[#allocation5 + $0x2c] sm:$0xf]
    %v111 = vld [vmem:[#allocation5 + $0x30] sm:$0xf]
    %v112 = vld [vmem:[#allocation5 + $0x34] sm:$0xf]
    %v113 = vld [vmem:[#allocation5 + $0x38] sm:$0xf]
    %v114 = vld [vmem:[#allocation5 + $0x3c] sm:$0xf]
    %v115 = vld [vmem:[#allocation5 + $0x40] sm:$0xf]
    %v116 = vld [vmem:[#allocation5 + $0x44] sm:$0xf]
    %v117 = vld [vmem:[#allocation5 + $0x48] sm:$0xf]
    %v118 = vld [vmem:[#allocation5 + $0x4c] sm:$0xf]
    %v119 = vld [vmem:[#allocation5 + $0x50] sm:$0xf]
    %v120 = vld [vmem:[#allocation5 + $0x54] sm:$0xf]
    %v121 = vld [vmem:[#allocation5 + $0x58] sm:$0xf]
    %v122 = vld [vmem:[#allocation5 + $0x5c] sm:$0xf]
    %v123 = vld [vmem:[#allocation5 + $0x60] sm:$0xf]
    %v124 = vld [vmem:[#allocation5 + $0x64] sm:$0xf]
    %v125 = vld [vmem:[#allocation5 + $0x68] sm:$0xf]
    %v126 = vld [vmem:[#allocation5 + $0x6c] sm:$0xf]
    %v127 = vld [vmem:[#allocation5 + $0x70] sm:$0xf]
    %v128 = vld [vmem:[#allocation5 + $0x74] sm:$0xf]
    %v129 = vld [vmem:[#allocation5 + $0x78] sm:$0xf]
    %v130 = vld [vmem:[#allocation5 + $0x7c] sm:$0xf]
    %v131 = vld [vmem:[#allocation5 + $0x80] sm:$0xf]
    %v132 = vld [vmem:[#allocation5 + $0x84] sm:$0xf]
    %v133 = vld [vmem:[#allocation5 + $0x88] sm:$0xf]
    %v134 = vld [vmem:[#allocation5 + $0x8c] sm:$0xf]
    %v135 = vld [vmem:[#allocation5 + $0x90] sm:$0xf]
    %v136 = vld [vmem:[#allocation5 + $0x94] sm:$0xf]
    %v137 = vld [vmem:[#allocation5 + $0x98] sm:$0xf]
    %v138 = vld [vmem:[#allocation5 + $0x9c] sm:$0xf]
    %v139 = vld [vmem:[#allocation5 + $0xa0] sm:$0xf]
    %v140 = vld [vmem:[#allocation5 + $0xa4] sm:$0xf]
    %v141 = vld [vmem:[#allocation5 + $0xa8] sm:$0xf]
    %v142 = vld [vmem:[#allocation5 + $0xac] sm:$0xf]
    %v143 = vld [vmem:[#allocation5 + $0xb0] sm:$0xf]
    %v144 = vld [vmem:[#allocation5 + $0xb4] sm:$0xf]
    %v145 = vld [vmem:[#allocation5 + $0xb8] sm:$0xf]
    %v146 = vld [vmem:[#allocation5 + $0xbc] sm:$0xf]
    %v147 = vld [vmem:[#allocation5 + $0xc0] sm:$0xf]
    %v148 = vld [vmem:[#allocation5 + $0xc4] sm:$0xf]
    %v149 = vld [vmem:[#allocation5 + $0xc8] sm:$0xf]
    %v150 = vld [vmem:[#allocation5 + $0xcc] sm:$0xf]
    %v151 = vld [vmem:[#allocation5 + $0xd0] sm:$0xf]
    %v152 = vld [vmem:[#allocation5 + $0xd4] sm:$0xf]
    %v153 = vld [vmem:[#allocation5 + $0xd8] sm:$0xf]
    %v154 = vld [vmem:[#allocation5 + $0xdc] sm:$0xf]
    %v155 = vld [vmem:[#allocation5 + $0xe0] sm:$0xf]
    %v156 = vld [vmem:[#allocation5 + $0xe4] sm:$0xf]
    %v157 = vld [vmem:[#allocation5 + $0xe8] sm:$0xf]
    %v158 = vld [vmem:[#allocation5 + $0xec] sm:$0xf]
    %v159 = vld [vmem:[#allocation5 + $0xf0] sm:$0xf]
    %v160 = vld [vmem:[#allocation5 + $0xf4] sm:$0xf]
    %v161 = vld [vmem:[#allocation5 + $0xf8] sm:$0xf]
    %v162 = vld [vmem:[#allocation5 + $0xfc] sm:$0xf]
    %v163 = vld [vmem:[#allocation5 + $0x100] sm:$0xf]
    %v164 = vld [vmem:[#allocation5 + $0x104] sm:$0xf]
    %v165 = vld [vmem:[#allocation5 + $0x108] sm:$0xf]
    %v166 = vld [vmem:[#allocation5 + $0x10c] sm:$0xf]
    %v167 = vld [vmem:[#allocation5 + $0x110] sm:$0xf]
    %v168 = vld [vmem:[#allocation5 + $0x114] sm:$0xf]
    %v169 = vld [vmem:[#allocation5 + $0x118] sm:$0xf]
    %v170 = vld [vmem:[#allocation5 + $0x11c] sm:$0xf]
    %v171 = vld [vmem:[#allocation5 + $0x120] sm:$0xf]
    %v172 = vld [vmem:[#allocation5 + $0x124] sm:$0xf]
    %v173 = vld [vmem:[#allocation5 + $0x128] sm:$0xf]
    %v174 = vld [vmem:[#allocation5 + $0x12c] sm:$0xf]
    %v175 = vld [vmem:[#allocation5 + $0x130] sm:$0xf]
    %v176 = vld [vmem:[#allocation5 + $0x134] sm:$0xf]
    %v177 = vld [vmem:[#allocation5 + $0x138] sm:$0xf]
    %v178 = vld [vmem:[#allocation5 + $0x13c] sm:$0xf]
    %v179 = vld [vmem:[#allocation5 + $0x140] sm:$0xf]
    %v180 = vld [vmem:[#allocation5 + $0x144] sm:$0xf]
    %v181 = vld [vmem:[#allocation5 + $0x148] sm:$0xf]
    %v182 = vld [vmem:[#allocation5 + $0x14c] sm:$0xf]
    %v183 = vld [vmem:[#allocation5 + $0x150] sm:$0xf]
    %v184 = vld [vmem:[#allocation5 + $0x154] sm:$0xf]
    %v185 = vld [vmem:[#allocation5 + $0x158] sm:$0xf]
    %v186 = vld [vmem:[#allocation5 + $0x15c] sm:$0xf]
    %v187 = vld [vmem:[#allocation5 + $0x160] sm:$0xf]
    %v188 = vld [vmem:[#allocation5 + $0x164] sm:$0xf]
    %v189 = vld [vmem:[#allocation5 + $0x168] sm:$0xf]
    %v190 = vld [vmem:[#allocation5 + $0x16c] sm:$0xf]
    %v191 = vld [vmem:[#allocation5 + $0x170] sm:$0xf]
    %v192 = vld [vmem:[#allocation5 + $0x174] sm:$0xf]
    %v193 = vld [vmem:[#allocation5 + $0x178] sm:$0xf]
    %v194 = vld [vmem:[#allocation5 + $0x17c] sm:$0xf]
    %v195 = vld [vmem:[#allocation5 + $0x180] sm:$0xf]
    %v196 = vld [vmem:[#allocation5 + $0x184] sm:$0xf]
    %v197 = vld [vmem:[#allocation5 + $0x188] sm:$0xf]
    %v198 = vld [vmem:[#allocation5 + $0x18c] sm:$0xf]
    %v199 = vld [vmem:[#allocation5 + $0x190] sm:$0xf]
    %v200 = vld [vmem:[#allocation5 + $0x194] sm:$0xf]
    %v201 = vld [vmem:[#allocation5 + $0x198] sm:$0xf]
    %v202 = vld [vmem:[#allocation5 + $0x19c] sm:$0xf]
    %v203 = vld [vmem:[#allocation5 + $0x1a0] sm:$0xf]
    %v204 = vld [vmem:[#allocation5 + $0x1a4] sm:$0xf]
    %v205 = vld [vmem:[#allocation5 + $0x1a8] sm:$0xf]
    %v206 = vld [vmem:[#allocation5 + $0x1ac] sm:$0xf]
    %v207 = vld [vmem:[#allocation5 + $0x1b0] sm:$0xf]
    %v208 = vld [vmem:[#allocation5 + $0x1b4] sm:$0xf]
    %v209 = vld [vmem:[#allocation5 + $0x1b8] sm:$0xf]
    %v210 = vld [vmem:[#allocation5 + $0x1bc] sm:$0xf]
    %v211 = vld [vmem:[%s2] sm:$0x1]
    %v213 = vlaneseq
    %v214 = vshrl.u32 %v213, 7
    %v215 = vsub.s32 0, %v214
    %v216 = vrot.slane %v211, %v215
    %v234 = vunpack.c.l.b16 %v83
    %v235 = vunpack.c.h.b16 %v83
    %v236 = vunpack.c.l.b16 %v84
    %v237 = vunpack.c.h.b16 %v84
    %v238 = vunpack.c.l.b16 %v85
    %v239 = vunpack.c.h.b16 %v85
    %v240 = vunpack.c.l.b16 %v86
    %v241 = vunpack.c.l.b16 %v87
    %v242 = vunpack.c.h.b16 %v87
    %v243 = vunpack.c.l.b16 %v88
    %v244 = vunpack.c.h.b16 %v88
    %v245 = vunpack.c.l.b16 %v89
    %v246 = vunpack.c.h.b16 %v89
    %v247 = vunpack.c.l.b16 %v90
    %v248 = vunpack.c.l.b16 %v91
    %v249 = vunpack.c.h.b16 %v91
    %v250 = vunpack.c.l.b16 %v92
    %v251 = vunpack.c.h.b16 %v92
    %v252 = vunpack.c.l.b16 %v93
    %v253 = vunpack.c.h.b16 %v93
    %v254 = vunpack.c.l.b16 %v94
    %v255 = vunpack.c.l.b16 %v95
    %v256 = vunpack.c.h.b16 %v95
    %v257 = vunpack.c.l.b16 %v96
    %v258 = vunpack.c.h.b16 %v96
    %v259 = vunpack.c.l.b16 %v97
    %v260 = vunpack.c.h.b16 %v97
    %v261 = vunpack.c.l.b16 %v98
    %v262 = vpack.c.b16 %v241, %v234
    %v263 = vpack.c.b16 %v242, %v235
    %v264 = vpack.c.b16 %v243, %v236
    %v265 = vpack.c.b16 %v244, %v237
    %v266 = vpack.c.b16 %v245, %v238
    %v267 = vpack.c.b16 %v246, %v239
    %v268 = vpack.c.b16 %v247, %v240
    %v269 = vpack.c.b16 %v255, %v248
    %v270 = vpack.c.b16 %v256, %v249
    %v271 = vpack.c.b16 %v257, %v250
    %v272 = vpack.c.b16 %v258, %v251
    %v273 = vpack.c.b16 %v259, %v252
    %v274 = vpack.c.b16 %v260, %v253
    %v275 = vpack.c.b16 %v261, %v254
    %v402 = vunpack.c.l.b16 %v99
    %v403 = vunpack.c.l.b16 %v100
    %v404 = vunpack.c.l.b16 %v101
    %v405 = vunpack.c.l.b16 %v102
    %v406 = vunpack.c.l.b16 %v103
    %v407 = vunpack.c.l.b16 %v104
    %v408 = vunpack.c.l.b16 %v105
    %v409 = vunpack.c.l.b16 %v106
    %v410 = vunpack.c.l.b16 %v107
    %v411 = vunpack.c.l.b16 %v108
    %v412 = vunpack.c.l.b16 %v109
    %v413 = vunpack.c.l.b16 %v110
    %v414 = vunpack.c.l.b16 %v111
    %v415 = vunpack.c.l.b16 %v112
    %v416 = vunpack.c.l.b16 %v113
    %v417 = vunpack.c.l.b16 %v114
    %v418 = vunpack.c.l.b16 %v115
    %v419 = vunpack.c.l.b16 %v116
    %v420 = vunpack.c.l.b16 %v117
    %v421 = vunpack.c.l.b16 %v118
    %v422 = vunpack.c.l.b16 %v119
    %v423 = vunpack.c.l.b16 %v120
    %v424 = vunpack.c.l.b16 %v121
    %v425 = vunpack.c.l.b16 %v122
    %v426 = vunpack.c.l.b16 %v123
    %v427 = vunpack.c.l.b16 %v124
    %v428 = vunpack.c.l.b16 %v125
    %v429 = vunpack.c.l.b16 %v126
    %v430 = vunpack.c.l.b16 %v127
    %v431 = vunpack.c.l.b16 %v128
    %v432 = vunpack.c.l.b16 %v129
    %v433 = vunpack.c.l.b16 %v130
    %v434 = vunpack.c.l.b16 %v131
    %v435 = vunpack.c.l.b16 %v132
    %v436 = vunpack.c.l.b16 %v133
    %v437 = vunpack.c.l.b16 %v134
    %v438 = vunpack.c.l.b16 %v135
    %v439 = vunpack.c.l.b16 %v136
    %v440 = vunpack.c.l.b16 %v137
    %v441 = vunpack.c.l.b16 %v138
    %v442 = vunpack.c.l.b16 %v139
    %v443 = vunpack.c.l.b16 %v140
    %v444 = vunpack.c.l.b16 %v141
    %v445 = vunpack.c.l.b16 %v142
    %v446 = vunpack.c.l.b16 %v143
    %v447 = vunpack.c.l.b16 %v144
    %v448 = vunpack.c.l.b16 %v145
    %v449 = vunpack.c.l.b16 %v146
    %v450 = vunpack.c.l.b16 %v147
    %v451 = vunpack.c.l.b16 %v148
    %v452 = vunpack.c.l.b16 %v149
    %v453 = vunpack.c.l.b16 %v150
    %v454 = vunpack.c.l.b16 %v151
    %v455 = vunpack.c.l.b16 %v152
    %v456 = vunpack.c.l.b16 %v153
    %v457 = vunpack.c.l.b16 %v154
    %v458 = vunpack.c.l.b16 %v155
    %v459 = vunpack.c.l.b16 %v156
    %v460 = vunpack.c.l.b16 %v157
    %v461 = vunpack.c.l.b16 %v158
    %v462 = vunpack.c.l.b16 %v159
    %v463 = vunpack.c.l.b16 %v160
    %v464 = vunpack.c.l.b16 %v161
    %v465 = vunpack.c.l.b16 %v162
    %v466 = vunpack.c.l.b16 %v163
    %v467 = vunpack.c.l.b16 %v164
    %v468 = vunpack.c.l.b16 %v165
    %v469 = vunpack.c.l.b16 %v166
    %v470 = vunpack.c.l.b16 %v167
    %v471 = vunpack.c.l.b16 %v168
    %v472 = vunpack.c.l.b16 %v169
    %v473 = vunpack.c.l.b16 %v170
    %v474 = vunpack.c.l.b16 %v171
    %v475 = vunpack.c.l.b16 %v172
    %v476 = vunpack.c.l.b16 %v173
    %v477 = vunpack.c.l.b16 %v174
    %v478 = vunpack.c.l.b16 %v175
    %v479 = vunpack.c.l.b16 %v176
    %v480 = vunpack.c.l.b16 %v177
    %v481 = vunpack.c.l.b16 %v178
    %v482 = vunpack.c.l.b16 %v179
    %v483 = vunpack.c.l.b16 %v180
    %v484 = vunpack.c.l.b16 %v181
    %v485 = vunpack.c.l.b16 %v182
    %v486 = vunpack.c.l.b16 %v183
    %v487 = vunpack.c.l.b16 %v184
    %v488 = vunpack.c.l.b16 %v185
    %v489 = vunpack.c.l.b16 %v186
    %v490 = vunpack.c.l.b16 %v187
    %v491 = vunpack.c.l.b16 %v188
    %v492 = vunpack.c.l.b16 %v189
    %v493 = vunpack.c.l.b16 %v190
    %v494 = vunpack.c.l.b16 %v191
    %v495 = vunpack.c.l.b16 %v192
    %v496 = vunpack.c.l.b16 %v193
    %v497 = vunpack.c.l.b16 %v194
    %v498 = vunpack.c.l.b16 %v195
    %v499 = vunpack.c.l.b16 %v196
    %v500 = vunpack.c.l.b16 %v197
    %v501 = vunpack.c.l.b16 %v198
    %v502 = vunpack.c.l.b16 %v199
    %v503 = vunpack.c.l.b16 %v200
    %v504 = vunpack.c.l.b16 %v201
    %v505 = vunpack.c.l.b16 %v202
    %v506 = vunpack.c.l.b16 %v203
    %v507 = vunpack.c.l.b16 %v204
    %v508 = vunpack.c.l.b16 %v205
    %v509 = vunpack.c.l.b16 %v206
    %v510 = vunpack.c.l.b16 %v207
    %v511 = vunpack.c.l.b16 %v208
    %v512 = vunpack.c.l.b16 %v209
    %v513 = vunpack.c.l.b16 %v210
    %v514 = vpack.c.b16 %v403, %v402
    %v515 = vpack.c.b16 %v405, %v404
    %v516 = vpack.c.b16 %v407, %v406
    %v517 = vpack.c.b16 %v409, %v408
    %v518 = vpack.c.b16 %v411, %v410
    %v519 = vpack.c.b16 %v413, %v412
    %v520 = vpack.c.b16 %v415, %v414
    %v521 = vpack.c.b16 %v417, %v416
    %v522 = vpack.c.b16 %v419, %v418
    %v523 = vpack.c.b16 %v421, %v420
    %v524 = vpack.c.b16 %v423, %v422
    %v525 = vpack.c.b16 %v425, %v424
    %v526 = vpack.c.b16 %v427, %v426
    %v527 = vpack.c.b16 %v429, %v428
    %v528 = vpack.c.b16 %v431, %v430
    %v529 = vpack.c.b16 %v433, %v432
    %v530 = vpack.c.b16 %v435, %v434
    %v531 = vpack.c.b16 %v437, %v436
    %v532 = vpack.c.b16 %v439, %v438
    %v533 = vpack.c.b16 %v441, %v440
    %v534 = vpack.c.b16 %v443, %v442
    %v535 = vpack.c.b16 %v445, %v444
    %v536 = vpack.c.b16 %v447, %v446
    %v537 = vpack.c.b16 %v449, %v448
    %v538 = vpack.c.b16 %v451, %v450
    %v539 = vpack.c.b16 %v453, %v452
    %v540 = vpack.c.b16 %v455, %v454
    %v541 = vpack.c.b16 %v457, %v456
    %v542 = vpack.c.b16 %v459, %v458
    %v543 = vpack.c.b16 %v461, %v460
    %v544 = vpack.c.b16 %v463, %v462
    %v545 = vpack.c.b16 %v465, %v464
    %v546 = vpack.c.b16 %v467, %v466
    %v547 = vpack.c.b16 %v469, %v468
    %v548 = vpack.c.b16 %v471, %v470
    %v549 = vpack.c.b16 %v473, %v472
    %v550 = vpack.c.b16 %v475, %v474
    %v551 = vpack.c.b16 %v477, %v476
    %v552 = vpack.c.b16 %v479, %v478
    %v553 = vpack.c.b16 %v481, %v480
    %v554 = vpack.c.b16 %v483, %v482
    %v555 = vpack.c.b16 %v485, %v484
    %v556 = vpack.c.b16 %v487, %v486
    %v557 = vpack.c.b16 %v489, %v488
    %v558 = vpack.c.b16 %v491, %v490
    %v559 = vpack.c.b16 %v493, %v492
    %v560 = vpack.c.b16 %v495, %v494
    %v561 = vpack.c.b16 %v497, %v496
    %v562 = vpack.c.b16 %v499, %v498
    %v563 = vpack.c.b16 %v501, %v500
    %v564 = vpack.c.b16 %v503, %v502
    %v565 = vpack.c.b16 %v505, %v504
    %v566 = vpack.c.b16 %v507, %v506
    %v567 = vpack.c.b16 %v509, %v508
    %v568 = vpack.c.b16 %v511, %v510
    %v569 = vpack.c.b16 %v513, %v512
    %626 = vmatprep.subr.bf16.mxu0 0
    %627 = vmatpush1.bf16.msra.mxu0 %v521
    %628 = vmatprep.subr.bf16.mxu0 0
    %629 = vmatpush1.bf16.msra.mxu0 %v520
    %630 = vmatprep.subr.bf16.mxu0 0
    %631 = vmatpush1.bf16.msra.mxu0 %v519
    %632 = vmatprep.subr.bf16.mxu0 0
    %633 = vmatpush1.bf16.msra.mxu0 %v518
    %634 = vmatprep.subr.bf16.mxu0 0
    %635 = vmatpush1.bf16.msra.mxu0 %v517
    %636 = vmatprep.subr.bf16.mxu0 0
    %637 = vmatpush1.bf16.msra.mxu0 %v516
    %638 = vmatprep.subr.bf16.mxu0 0
    %639 = vmatpush1.bf16.msra.mxu0 %v515
    %640 = vmatprep.subr.bf16.mxu0 0
    %641 = vmatpush1.bf16.msra.mxu0 %v514
    %642 = vmatprep.subr.bf16.mxu0 0
    %643 = vmatpush2.bf16.msra.mxu0 %v529
    %644 = vmatprep.subr.bf16.mxu0 0
    %645 = vmatpush2.bf16.msra.mxu0 %v528
    %646 = vmatprep.subr.bf16.mxu0 0
    %647 = vmatpush2.bf16.msra.mxu0 %v527
    %648 = vmatprep.subr.bf16.mxu0 0
    %649 = vmatpush2.bf16.msra.mxu0 %v526
    %650 = vmatprep.subr.bf16.mxu0 0
    %651 = vmatpush2.bf16.msra.mxu0 %v525
    %652 = vmatprep.subr.bf16.mxu0 0
    %653 = vmatpush2.bf16.msra.mxu0 %v524
    %654 = vmatprep.subr.bf16.mxu0 0
    %655 = vmatpush2.bf16.msra.mxu0 %v523
    %656 = vmatprep.subr.bf16.mxu0 0
    %657 = vmatpush2.bf16.msra.mxu0 %v522
    %658 = vmatprep.mubr.bf16.mxu0 %v263
    %659 = vmatmul.mubr.bf16.gmra.mxu0 %v262
    %v660 = vpop.f32.mrf.mxu0
    %v661 = vadd.f32 %v216, %v660
    %v662 = vpop.f32.mrf.mxu0
    %v663 = vpop.f32.mrf.mxu0
    %v664 = vadd.f32 %v216, %v663
    %v665 = vpop.f32.mrf.mxu0
    %666 = vmatprep.mubr.bf16.mxu0 %v270
    %667 = vmatmul.mubr.bf16.gmra.mxu0 %v269
    %v668 = vpop.f32.mrf.mxu0
    %v669 = vadd.f32 %v216, %v668
    %v670 = vpop.f32.mrf.mxu0
    %v671 = vpop.f32.mrf.mxu0
    %v672 = vadd.f32 %v216, %v671
    %v673 = vpop.f32.mrf.mxu0
    %674 = vdwg.mxu0
    %675 = vmatprep.subr.bf16.mxu0 0
    %676 = vmatpush1.bf16.msra.mxu0 %v537
    %677 = vmatprep.subr.bf16.mxu0 0
    %678 = vmatpush1.bf16.msra.mxu0 %v536
    %679 = vmatprep.subr.bf16.mxu0 0
    %680 = vmatpush1.bf16.msra.mxu0 %v535
    %681 = vmatprep.subr.bf16.mxu0 0
    %682 = vmatpush1.bf16.msra.mxu0 %v534
    %683 = vmatprep.subr.bf16.mxu0 0
    %684 = vmatpush1.bf16.msra.mxu0 %v533
    %685 = vmatprep.subr.bf16.mxu0 0
    %686 = vmatpush1.bf16.msra.mxu0 %v532
    %687 = vmatprep.subr.bf16.mxu0 0
    %688 = vmatpush1.bf16.msra.mxu0 %v531
    %689 = vmatprep.subr.bf16.mxu0 0
    %690 = vmatpush1.bf16.msra.mxu0 %v530
    %691 = vmatprep.subr.bf16.mxu0 0
    %692 = vmatpush2.bf16.msra.mxu0 %v545
    %693 = vmatprep.subr.bf16.mxu0 0
    %694 = vmatpush2.bf16.msra.mxu0 %v544
    %695 = vmatprep.subr.bf16.mxu0 0
    %696 = vmatpush2.bf16.msra.mxu0 %v543
    %697 = vmatprep.subr.bf16.mxu0 0
    %698 = vmatpush2.bf16.msra.mxu0 %v542
    %699 = vmatprep.subr.bf16.mxu0 0
    %700 = vmatpush2.bf16.msra.mxu0 %v541
    %701 = vmatprep.subr.bf16.mxu0 0
    %702 = vmatpush2.bf16.msra.mxu0 %v540
    %703 = vmatprep.subr.bf16.mxu0 0
    %704 = vmatpush2.bf16.msra.mxu0 %v539
    %705 = vmatprep.subr.bf16.mxu0 0
    %706 = vmatpush2.bf16.msra.mxu0 %v538
    %707 = vmatprep.mubr.bf16.mxu0 %v265
    %708 = vmatmul.mubr.bf16.gmra.mxu0 %v264
    %v709 = vpop.f32.mrf.mxu0
    %v710 = vadd.f32 %v661, %v709
    %v711 = vpop.f32.mrf.mxu0
    %v712 = vpop.f32.mrf.mxu0
    %v713 = vadd.f32 %v664, %v712
    %v714 = vpop.f32.mrf.mxu0
    %715 = vmatprep.mubr.bf16.mxu0 %v272
    %716 = vmatmul.mubr.bf16.gmra.mxu0 %v271
    %v717 = vpop.f32.mrf.mxu0
    %v718 = vadd.f32 %v669, %v717
    %v719 = vpop.f32.mrf.mxu0
    %v720 = vpop.f32.mrf.mxu0
    %v721 = vadd.f32 %v672, %v720
    %v722 = vpop.f32.mrf.mxu0
    %723 = vdwg.mxu0
    %724 = vmatprep.subr.bf16.mxu0 0
    %725 = vmatpush1.bf16.msra.mxu0 %v553
    %726 = vmatprep.subr.bf16.mxu0 0
    %727 = vmatpush1.bf16.msra.mxu0 %v552
    %728 = vmatprep.subr.bf16.mxu0 0
    %729 = vmatpush1.bf16.msra.mxu0 %v551
    %730 = vmatprep.subr.bf16.mxu0 0
    %731 = vmatpush1.bf16.msra.mxu0 %v550
    %732 = vmatprep.subr.bf16.mxu0 0
    %733 = vmatpush1.bf16.msra.mxu0 %v549
    %734 = vmatprep.subr.bf16.mxu0 0
    %735 = vmatpush1.bf16.msra.mxu0 %v548
    %736 = vmatprep.subr.bf16.mxu0 0
    %737 = vmatpush1.bf16.msra.mxu0 %v547
    %738 = vmatprep.subr.bf16.mxu0 0
    %739 = vmatpush1.bf16.msra.mxu0 %v546
    %740 = vmatprep.subr.bf16.mxu0 0
    %741 = vmatpush2.bf16.msra.mxu0 %v561
    %742 = vmatprep.subr.bf16.mxu0 0
    %743 = vmatpush2.bf16.msra.mxu0 %v560
    %744 = vmatprep.subr.bf16.mxu0 0
    %745 = vmatpush2.bf16.msra.mxu0 %v559
    %746 = vmatprep.subr.bf16.mxu0 0
    %747 = vmatpush2.bf16.msra.mxu0 %v558
    %748 = vmatprep.subr.bf16.mxu0 0
    %749 = vmatpush2.bf16.msra.mxu0 %v557
    %750 = vmatprep.subr.bf16.mxu0 0
    %751 = vmatpush2.bf16.msra.mxu0 %v556
    %752 = vmatprep.subr.bf16.mxu0 0
    %753 = vmatpush2.bf16.msra.mxu0 %v555
    %754 = vmatprep.subr.bf16.mxu0 0
    %755 = vmatpush2.bf16.msra.mxu0 %v554
    %756 = vmatprep.mubr.bf16.mxu0 %v267
    %757 = vmatmul.mubr.bf16.gmra.mxu0 %v266
    %v758 = vpop.f32.mrf.mxu0
    %v759 = vadd.f32 %v710, %v758
    %v760 = vpop.f32.mrf.mxu0
    %v761 = vpop.f32.mrf.mxu0
    %v762 = vadd.f32 %v713, %v761
    %v763 = vpop.f32.mrf.mxu0
    %764 = vmatprep.mubr.bf16.mxu0 %v274
    %765 = vmatmul.mubr.bf16.gmra.mxu0 %v273
    %v766 = vpop.f32.mrf.mxu0
    %v767 = vadd.f32 %v718, %v766
    %v768 = vpop.f32.mrf.mxu0
    %v769 = vpop.f32.mrf.mxu0
    %v770 = vadd.f32 %v721, %v769
    %v771 = vpop.f32.mrf.mxu0
    %772 = vdwg.mxu0
    %773 = vmatprep.subr.bf16.mxu0 0
    %774 = vmatpush1.bf16.msra.mxu0 %v569
    %775 = vmatprep.subr.bf16.mxu0 0
    %776 = vmatpush1.bf16.msra.mxu0 %v568
    %777 = vmatprep.subr.bf16.mxu0 0
    %778 = vmatpush1.bf16.msra.mxu0 %v567
    %779 = vmatprep.subr.bf16.mxu0 0
    %780 = vmatpush1.bf16.msra.mxu0 %v566
    %781 = vmatprep.subr.bf16.mxu0 0
    %782 = vmatpush1.bf16.msra.mxu0 %v565
    %783 = vmatprep.subr.bf16.mxu0 0
    %784 = vmatpush1.bf16.msra.mxu0 %v564
    %785 = vmatprep.subr.bf16.mxu0 0
    %786 = vmatpush1.bf16.msra.mxu0 %v563
    %787 = vmatprep.subr.bf16.mxu0 0
    %788 = vmatpush1.bf16.msra.mxu0 %v562
    %789 = vmatprep.subr.bf16.mxu0 0
    %790 = vmatpush2.bf16.msra.mxu0 0
    %791 = vmatprep.subr.bf16.mxu0 0
    %792 = vmatpush2.bf16.msra.mxu0 0
    %793 = vmatprep.subr.bf16.mxu0 0
    %794 = vmatpush2.bf16.msra.mxu0 0
    %795 = vmatprep.subr.bf16.mxu0 0
    %796 = vmatpush2.bf16.msra.mxu0 0
    %797 = vmatprep.subr.bf16.mxu0 0
    %798 = vmatpush2.bf16.msra.mxu0 0
    %799 = vmatprep.subr.bf16.mxu0 0
    %800 = vmatpush2.bf16.msra.mxu0 0
    %801 = vmatprep.subr.bf16.mxu0 0
    %802 = vmatpush2.bf16.msra.mxu0 0
    %803 = vmatprep.subr.bf16.mxu0 0
    %804 = vmatpush2.bf16.msra.mxu0 0
    %805 = vmatprep.mubr.bf16.mxu0 0
    %806 = vmatmul.mubr.bf16.gmra.mxu0 %v268
    %v807 = vpop.f32.mrf.mxu0
    %v808 = vadd.f32 %v759, %v807
    %v809 = vpop.f32.mrf.mxu0
    %v810 = vpop.f32.mrf.mxu0
    %v811 = vadd.f32 %v762, %v810
    %v812 = vpop.f32.mrf.mxu0
    %813 = vmatprep.mubr.bf16.mxu0 0
    %814 = vmatmul.mubr.bf16.gmra.mxu0 %v275
    %v815 = vpop.f32.mrf.mxu0
    %v816 = vadd.f32 %v767, %v815
    %v817 = vpop.f32.mrf.mxu0
    %v818 = vpop.f32.mrf.mxu0
    %v819 = vadd.f32 %v770, %v818
    %v820 = vpop.f32.mrf.mxu0
    %821 = vdwg.mxu0
    %v822 = vmax.f32 %v808, 0.0
    %v823 = vmax.f32 %v811, 0.0
    %v824 = vmax.f32 %v816, 0.0
    %v825 = vmax.f32 %v819, 0.0
    %v826 = vld [vmem:[#allocation7] sm:$0xf]
    %v827 = vld [vmem:[#allocation7 + $0x4] sm:$0xf]
    %v828 = vld [vmem:[#allocation7 + $0x8] sm:$0xf]
    %v829 = vld [vmem:[#allocation7 + $0xc] sm:$0xf]
    %v830 = vld [vmem:[#allocation7 + $0x10] sm:$0xf]
    %v831 = vld [vmem:[#allocation7 + $0x14] sm:$0xf]
    %v832 = vld [vmem:[#allocation7 + $0x18] sm:$0xf]
    %v833 = vld [vmem:[#allocation7 + $0x1c] sm:$0xf]
    %v834 = vld [vmem:[#allocation7 + $0x20] sm:$0xf]
    %v835 = vld [vmem:[#allocation7 + $0x24] sm:$0xf]
    %v836 = vld [vmem:[#allocation7 + $0x28] sm:$0xf]
    %v837 = vld [vmem:[#allocation7 + $0x2c] sm:$0xf]
    %v838 = vld [vmem:[#allocation7 + $0x30] sm:$0xf]
    %v839 = vld [vmem:[#allocation7 + $0x34] sm:$0xf]
    %v840 = vld [vmem:[#allocation7 + $0x38] sm:$0xf]
    %v841 = vld [vmem:[#allocation7 + $0x3c] sm:$0xf]
    %v842 = vld [vmem:[%s4] sm:$0x1]
    %v843 = vpack.c.bf16 %v823, %v822
    %v844 = vpack.c.bf16 %v825, %v824
    %v846 = vlaneseq
    %v847 = vshrl.u32 %v846, 7
    %v848 = vsub.s32 0, %v847
    %v849 = vrot.slane %v842, %v848
    %v867 = vunpack.c.l.b16 %v826
    %v868 = vunpack.c.l.b16 %v827
    %v869 = vunpack.c.l.b16 %v828
    %v870 = vunpack.c.l.b16 %v829
    %v871 = vunpack.c.l.b16 %v830
    %v872 = vunpack.c.l.b16 %v831
    %v873 = vunpack.c.l.b16 %v832
    %v874 = vunpack.c.l.b16 %v833
    %v875 = vunpack.c.l.b16 %v834
    %v876 = vunpack.c.l.b16 %v835
    %v877 = vunpack.c.l.b16 %v836
    %v878 = vunpack.c.l.b16 %v837
    %v879 = vunpack.c.l.b16 %v838
    %v880 = vunpack.c.l.b16 %v839
    %v881 = vunpack.c.l.b16 %v840
    %v882 = vunpack.c.l.b16 %v841
    %v883 = vpack.c.b16 %v868, %v867
    %v884 = vpack.c.b16 %v870, %v869
    %v885 = vpack.c.b16 %v872, %v871
    %v886 = vpack.c.b16 %v874, %v873
    %v887 = vpack.c.b16 %v876, %v875
    %v888 = vpack.c.b16 %v878, %v877
    %v889 = vpack.c.b16 %v880, %v879
    %v890 = vpack.c.b16 %v882, %v881
    %899 = vmatprep.subr.bf16.mxu0 0
    %900 = vmatpush1.bf16.msra.mxu0 %v890
    %901 = vmatprep.subr.bf16.mxu0 0
    %902 = vmatpush1.bf16.msra.mxu0 %v889
    %903 = vmatprep.subr.bf16.mxu0 0
    %904 = vmatpush1.bf16.msra.mxu0 %v888
    %905 = vmatprep.subr.bf16.mxu0 0
    %906 = vmatpush1.bf16.msra.mxu0 %v887
    %907 = vmatprep.subr.bf16.mxu0 0
    %908 = vmatpush1.bf16.msra.mxu0 %v886
    %909 = vmatprep.subr.bf16.mxu0 0
    %910 = vmatpush1.bf16.msra.mxu0 %v885
    %911 = vmatprep.subr.bf16.mxu0 0
    %912 = vmatpush1.bf16.msra.mxu0 %v884
    %913 = vmatprep.subr.bf16.mxu0 0
    %914 = vmatpush1.bf16.msra.mxu0 %v883
    %915 = vmatprep.subr.bf16.mxu0 0
    %916 = vmatpush2.bf16.msra.mxu0 0
    %917 = vmatprep.subr.bf16.mxu0 0
    %918 = vmatpush2.bf16.msra.mxu0 0
    %919 = vmatprep.subr.bf16.mxu0 0
    %920 = vmatpush2.bf16.msra.mxu0 0
    %921 = vmatprep.subr.bf16.mxu0 0
    %922 = vmatpush2.bf16.msra.mxu0 0
    %923 = vmatprep.subr.bf16.mxu0 0
    %924 = vmatpush2.bf16.msra.mxu0 0
    %925 = vmatprep.subr.bf16.mxu0 0
    %926 = vmatpush2.bf16.msra.mxu0 0
    %927 = vmatprep.subr.bf16.mxu0 0
    %928 = vmatpush2.bf16.msra.mxu0 0
    %929 = vmatprep.subr.bf16.mxu0 0
    %930 = vmatpush2.bf16.msra.mxu0 0
    %931 = vmatprep.mubr.bf16.mxu0 0
    %932 = vmatmul.mubr.bf16.gmra.mxu0 %v843
    %v933 = vpop.f32.mrf.mxu0
    %v934 = vadd.f32 %v849, %v933
    %v935 = vpop.f32.mrf.mxu0
    %v936 = vpop.f32.mrf.mxu0
    %v937 = vadd.f32 %v849, %v936
    %v938 = vpop.f32.mrf.mxu0
    %939 = vmatprep.mubr.bf16.mxu0 0
    %940 = vmatmul.mubr.bf16.gmra.mxu0 %v844
    %v941 = vpop.f32.mrf.mxu0
    %v942 = vadd.f32 %v849, %v941
    %v943 = vpop.f32.mrf.mxu0
    %v944 = vpop.f32.mrf.mxu0
    %v945 = vadd.f32 %v849, %v944
    %v946 = vpop.f32.mrf.mxu0
    %947 = vdwg.mxu0
    %v948 = vtanh.pop %v934
    %v949 = vtanh.pop %v937
    %v950 = vtanh.pop %v942
    %v951 = vtanh.pop %v945
    %v952 = vld [vmem:[#allocation8] sm:$0xf]
    %v953 = vld [vmem:[#allocation8 + $0x4] sm:$0xf]
    %v954 = vld [vmem:[#allocation8 + $0x8] sm:$0xf]
    %v955 = vld [vmem:[#allocation8 + $0xc] sm:$0xf]
    %v956 = vld [vmem:[#allocation8 + $0x10] sm:$0xf]
    %v957 = vld [vmem:[#allocation8 + $0x14] sm:$0xf]
    %v958 = vld [vmem:[#allocation8 + $0x18] sm:$0xf]
    %v959 = vld [vmem:[#allocation8 + $0x1c] sm:$0xf]
    %v960 = vld [vmem:[#allocation8 + $0x20] sm:$0xf]
    %v961 = vld [vmem:[#allocation8 + $0x24] sm:$0xf]
    %v962 = vld [vmem:[#allocation8 + $0x28] sm:$0xf]
    %v963 = vld [vmem:[#allocation8 + $0x2c] sm:$0xf]
    %v964 = vld [vmem:[#allocation8 + $0x30] sm:$0xf]
    %v965 = vld [vmem:[#allocation8 + $0x34] sm:$0xf]
    %v966 = vld [vmem:[#allocation8 + $0x38] sm:$0xf]
    %v967 = vld [vmem:[#allocation8 + $0x3c] sm:$0xf]
    %v968 = vld [vmem:[%s6] sm:$0x1]
    %v969 = vpack.c.bf16 %v949, %v948
    %v970 = vpack.c.bf16 %v951, %v950
    %v972 = vlaneseq
    %v973 = vshrl.u32 %v972, 7
    %v974 = vsub.s32 0, %v973
    %v975 = vrot.slane %v968, %v974
    %v993 = vunpack.c.l.b16 %v952
    %v994 = vunpack.c.l.b16 %v953
    %v995 = vunpack.c.l.b16 %v954
    %v996 = vunpack.c.l.b16 %v955
    %v997 = vunpack.c.l.b16 %v956
    %v998 = vunpack.c.l.b16 %v957
    %v999 = vunpack.c.l.b16 %v958
    %v1000 = vunpack.c.l.b16 %v959
    %v1001 = vunpack.c.l.b16 %v960
    %v1002 = vunpack.c.l.b16 %v961
    %v1003 = vunpack.c.l.b16 %v962
    %v1004 = vunpack.c.l.b16 %v963
    %v1005 = vunpack.c.l.b16 %v964
    %v1006 = vunpack.c.l.b16 %v965
    %v1007 = vunpack.c.l.b16 %v966
    %v1008 = vunpack.c.l.b16 %v967
    %v1009 = vpack.c.b16 %v994, %v993
    %v1010 = vpack.c.b16 %v996, %v995
    %v1011 = vpack.c.b16 %v998, %v997
    %v1012 = vpack.c.b16 %v1000, %v999
    %v1013 = vpack.c.b16 %v1002, %v1001
    %v1014 = vpack.c.b16 %v1004, %v1003
    %v1015 = vpack.c.b16 %v1006, %v1005
    %v1016 = vpack.c.b16 %v1008, %v1007
    %1025 = vmatprep.subr.bf16.mxu0 0
    %1026 = vmatpush1.bf16.msra.mxu0 %v1016
    %1027 = vmatprep.subr.bf16.mxu0 0
    %1028 = vmatpush1.bf16.msra.mxu0 %v1015
    %1029 = vmatprep.subr.bf16.mxu0 0
    %1030 = vmatpush1.bf16.msra.mxu0 %v1014
    %1031 = vmatprep.subr.bf16.mxu0 0
    %1032 = vmatpush1.bf16.msra.mxu0 %v1013
    %1033 = vmatprep.subr.bf16.mxu0 0
    %1034 = vmatpush1.bf16.msra.mxu0 %v1012
    %1035 = vmatprep.subr.bf16.mxu0 0
    %1036 = vmatpush1.bf16.msra.mxu0 %v1011
    %1037 = vmatprep.subr.bf16.mxu0 0
    %1038 = vmatpush1.bf16.msra.mxu0 %v1010
    %1039 = vmatprep.subr.bf16.mxu0 0
    %1040 = vmatpush1.bf16.msra.mxu0 %v1009
    %1041 = vmatprep.subr.bf16.mxu0 0
    %1042 = vmatpush2.bf16.msra.mxu0 0
    %1043 = vmatprep.subr.bf16.mxu0 0
    %1044 = vmatpush2.bf16.msra.mxu0 0
    %1045 = vmatprep.subr.bf16.mxu0 0
    %1046 = vmatpush2.bf16.msra.mxu0 0
    %1047 = vmatprep.subr.bf16.mxu0 0
    %1048 = vmatpush2.bf16.msra.mxu0 0
    %1049 = vmatprep.subr.bf16.mxu0 0
    %1050 = vmatpush2.bf16.msra.mxu0 0
    %1051 = vmatprep.subr.bf16.mxu0 0
    %1052 = vmatpush2.bf16.msra.mxu0 0
    %1053 = vmatprep.subr.bf16.mxu0 0
    %1054 = vmatpush2.bf16.msra.mxu0 0
    %1055 = vmatprep.subr.bf16.mxu0 0
    %1056 = vmatpush2.bf16.msra.mxu0 0
    %1057 = vmatprep.mubr.bf16.mxu0 0
    %1058 = vmatmul.mubr.bf16.gmra.mxu0 %v969
    %v1059 = vpop.f32.mrf.mxu0
    %v1060 = vadd.f32 %v975, %v1059
    %v1061 = vpop.f32.mrf.mxu0
    %v1062 = vpop.f32.mrf.mxu0
    %v1063 = vadd.f32 %v975, %v1062
    %v1064 = vpop.f32.mrf.mxu0
    %1065 = vmatprep.mubr.bf16.mxu0 0
    %1066 = vmatmul.mubr.bf16.gmra.mxu0 %v970
    %v1067 = vpop.f32.mrf.mxu0
    %v1068 = vadd.f32 %v975, %v1067
    %v1069 = vpop.f32.mrf.mxu0
    %v1070 = vpop.f32.mrf.mxu0
    %v1071 = vadd.f32 %v975, %v1070
    %v1072 = vpop.f32.mrf.mxu0
    %1073 = vdwg.mxu0
    %v1074 = vlaneseq
    %v1075 = vand.u32 %v1074, 127
    %vm1076 = vcmp.lt.s32.totalorder %v1075, 10
    %v1077 = vsel %vm1076, %v1060, -1e+30
    %v1078 = vsel %vm1076, %v1063, -1e+30
    %v1079 = vsel %vm1076, %v1068, -1e+30
    %v1080 = vsel %vm1076, %v1071, -1e+30
    %1081 = vmax.xlane.f32.xlu0 %v1077
    %v1082 = vpop.xlane.xlu0 %1081
    %1083 = vmax.xlane.f32.xlu0 %v1078
    %v1084 = vpop.xlane.xlu0 %1083
    %1085 = vmax.xlane.f32.xlu0 %v1079
    %v1086 = vpop.xlane.xlu0 %1085
    %1087 = vmax.xlane.f32.xlu0 %v1080
    %v1088 = vpop.xlane.xlu0 %1087
    %v1089 = vsub.f32 %v1077, %v1082
    %v1090 = vsub.f32 %v1078, %v1084
    %v1091 = vsub.f32 %v1079, %v1086
    %v1092 = vsub.f32 %v1080, %v1088
    %v1093 = vmul.f32 %v1089, 1.442695
    %v1094 = vpow.pop %v1093
    %v1095 = vmul.f32 %v1090, 1.442695
    %v1096 = vpow.pop %v1095
    %v1097 = vmul.f32 %v1091, 1.442695
    %v1098 = vpow.pop %v1097
    %v1099 = vmul.f32 %v1092, 1.442695
    %v1100 = vpow.pop %v1099
    %1101 = vadd.xlane.f32.xlu0 %v1094
    %v1102 = vpop.xlane.xlu0 %1101
    %1103 = vadd.xlane.f32.xlu0 %v1096
    %v1104 = vpop.xlane.xlu0 %1103
    %1105 = vadd.xlane.f32.xlu0 %v1098
    %v1106 = vpop.xlane.xlu0 %1105
    %1107 = vadd.xlane.f32.xlu0 %v1100
    %v1108 = vpop.xlane.xlu0 %1107
    %v1109 = vlog2.pop %v1102
    %v1110 = vmul.f32 %v1109, 0.6931472
    %v1111 = vlog2.pop %v1104
    %v1112 = vmul.f32 %v1111, 0.6931472
    %v1113 = vlog2.pop %v1106
    %v1114 = vmul.f32 %v1113, 0.6931472
    %v1115 = vlog2.pop %v1108
    %v1116 = vmul.f32 %v1115, 0.6931472
    %v1117 = vsub.f32 %v1089, %v1110
    %v1118 = vsub.f32 %v1090, %v1112
    %v1119 = vsub.f32 %v1091, %v1114
    %v1120 = vsub.f32 %v1092, %v1116
    %v1121 = vsel %vm1076, %v1117, 0.0
    %v1122 = vsel %vm1076, %v1118, 0.0
    %v1123 = vsel %vm1076, %v1119, 0.0
    %v1124 = vsel %vm1076, %v1120, 0.0
    %1125 = vst [vmem:[#allocation10] sm:$0xff] %v1121
    %1126 = vst [vmem:[#allocation10 + $0x8] sm:$0xff] %v1122
    %1127 = vst [vmem:[#allocation10 + $0x10] sm:$0xff] %v1123
    %1128 = vst [vmem:[#allocation10 + $0x18] sm:$0xff] %v1124
    // Predicated region
    $region46: #{tpu_custom_call.1} parent=1 // pred_check
      _
    $region47: #{tpu_custom_call.1} parent=1 // pred_check_branch
      %1130 = sbr.rel (0) target = $region49
    $region48: #{tpu_custom_call.1} parent=1 // pred_region
      %s1132 = ssub.s32 512, 512
      %1133 = vsyncadd [#allocation4], %s1132
      %s1134 = sshll.u32 [#allocation10], 4
      %s1135 = int_to_ptr.vmem [resolvable:$true] %s1134
      %1140 = dma.vmem_to_hbm [thread:$0]  %s1135, 512, %s7, [#allocation4], 128, 128, 8
    $region49: #{tpu_custom_call.1} parent=1 // pred_fallthru
      _
    // Predicated region
    $region50: #{tpu_custom_call.1} parent=1 // pred_check
      _
    $region51: #{tpu_custom_call.1} parent=1 // pred_check_branch
      %1142 = sbr.rel (0) target = $region53
    $region52: #{tpu_custom_call.1} parent=1 // pred_region
      %1143 = dma.done [#allocation4], 512
    $region53: #{tpu_custom_call.1} parent=1 // pred_fallthru
      _
    %1144 = vsyncpa [#allocation3], 1
    %1145 = vsyncpa [#allocation6], 1
    %1146 = vsyncpa [#allocation9], 1
    %1147 = vsyncpa [#allocation4], 1

</llo_original>
